<compile_context>
chip_gen: v6e
topology: v6e:2x2x1
jax: 0.10.0
libtpu: 0.0.40
codegen_flags: <defaults>
</compile_context>

<pallas_src>
import jax
import jax.numpy as jnp
from jax.experimental import pallas as pl
from jax.experimental.pallas import tpu as pltpu


# ---------------------------------------------------------------------------
# Kernel 1: masked reconstruction-error per-row partial sums
#   grid = (batch tiles [parallel], C*H*W tiles [arbitrary / reduction])
# ---------------------------------------------------------------------------
def _recon_kernel(xr_ref, x_ref, m_ref, out_ref):
    xr = xr_ref[...].astype(jnp.float32)          # (TB, TP) cast after load
    x = x_ref[...].astype(jnp.float32)
    m = m_ref[...]                                # (1, TP) -> broadcast rows
    xr = jnp.where(jnp.isnan(xr), 0.0, xr)
    x = jnp.where(jnp.isnan(x), 0.0, x)
    d = (xr - x) * m
    partial = jnp.sum(d * d, axis=1, keepdims=True)   # (TB, 1)

    @pl.when(pl.program_id(1) == 0)
    def _():
        out_ref[...] = partial

    @pl.when(pl.program_id(1) != 0)
    def _():
        out_ref[...] += partial


def _choose_batch_tile(batch, row_bytes, sublane, target=4 << 20):
    """Pick (tb, padded_batch). Prefers: no padding, ~4 MiB input blocks,
    >=2 parallel grid steps when batch > 8 (v7x megacore)."""
    if batch <= sublane:
        return batch, batch                       # single block == array dims
    cap = max(sublane, (target // max(row_bytes, 1)) // sublane * sublane)
    # keep at least 2 grid steps along the parallel batch axis
    cap = min(cap, max(sublane, (batch // 2) // sublane * sublane))
    # prefer a tile that divides batch exactly -> no wrapper-side pad copy
    for tb in range(cap, sublane - 1, -sublane):
        if batch % tb == 0:
            return tb, batch
    if batch * row_bytes <= target:               # awkward batch: one block
        return batch, batch
    tb = cap
    return tb, ((batch + tb - 1) // tb) * tb


def _choose_p_tile(p, itemsize, tb, target=4 << 20):
    """Tile the flattened C*H*W axis. Full row if it fits ~4 MiB; otherwise
    the largest 128-multiple divisor of P that fits the budget."""
    if tb * p * itemsize <= target or p % 128 != 0:
        # block dim == array dim is always legal (no 128-multiple needed)
        return p
    lane_budget = max(128, (target // max(tb * itemsize, 1)) // 128 * 128)
    q = p // 128
    best = 128
    d = 1
    while d * d <= q:
        if q % d == 0:
            for cand in (d, q // d):
                tp = cand * 128
                if best < tp <= lane_budget:
                    best = tp
        d += 1
    return best


def masked_recon_row_sums(xr2, x2, mask_row, tb, tp):
    b_pad, p = x2.shape
    grid = (b_pad // tb, p // tp)
    itemsize = jnp.dtype(x2.dtype).itemsize
    blk_in = tb * tp * itemsize
    # 2 inputs x 2 pipeline buffers + mask + resident output, with headroom.
    need = 2 * (2 * blk_in) + 2 * (tp * 4) + 2 * (tb * 4)
    vmem_limit = int(min(max(2 * need, 32 << 20), 64 << 20))
    return pl.pallas_call(
        _recon_kernel,
        out_shape=jax.ShapeDtypeStruct((b_pad, 1), jnp.float32),
        grid=grid,
        in_specs=[
            pl.BlockSpec((tb, tp), lambda b, k: (b, k)),
            pl.BlockSpec((tb, tp), lambda b, k: (b, k)),
            pl.BlockSpec((1, tp), lambda b, k: (0, k)),   # broadcast mask row
        ],
        out_specs=pl.BlockSpec((tb, 1), lambda b, k: (b, 0)),   # resident acc
        compiler_params=pltpu.CompilerParams(
            dimension_semantics=("parallel", "arbitrary"),
            vmem_limit_bytes=vmem_limit),
    )(xr2, x2, mask_row)


# ---------------------------------------------------------------------------
# Kernel 2: multi-kernel RBF MMD between z samples and the N(0, I) prior
#   Row-tiled over the (B, B) kernel matrix; per-row partial sums.
# ---------------------------------------------------------------------------
def _make_mmd_kernel(sigma_list, dim, batch):
    inv_d2 = 1.0 / float(dim * dim)   # (x-y)^2.mean(dim)/dim == ||x-y||^2/dim^2
    scale = 1.0 / (float(batch * batch) * float(len(sigma_list)))

    def kernel(z_ref, p_ref, zT_ref, pT_ref, z2r_ref, p2r_ref,
               vcol_ref, vrow_ref, out_ref):
        z = z_ref[...].astype(jnp.float32)        # (TB, D) row tile
        p = p_ref[...].astype(jnp.float32)
        zT = zT_ref[...]                          # (D, B) resident
        pT = pT_ref[...]
        z2c = jnp.sum(z * z, axis=1, keepdims=True)   # (TB, 1)
        p2c = jnp.sum(p * p, axis=1, keepdims=True)

        def rbf_sum(col_sq, row_sq_ref, lhs, rhsT, weight, acc):
            # Standard (M,K)x(K,N) MXU orientation -> no in-kernel transpose.
            g = jnp.dot(lhs, rhsT, preferred_element_type=jnp.float32)
            dist = jnp.maximum(col_sq + row_sq_ref[...] - 2.0 * g, 0.0) * inv_d2
            for s in sigma_list:                  # static loop over sigmas
                c = -1.0 / (2.0 * float(s) ** 2)
                # TODO(synk): bf16 exp on v6e/v7x EUP (acc stays f32) ~2x exp.
                acc = acc + weight * jnp.exp(dist * c)
            return acc                            # Gram `g` dead after here

        acc = jnp.zeros((z.shape[0], zT.shape[1]), jnp.float32)
        acc = rbf_sum(z2c, z2r_ref, z, zT, 1.0, acc)    # k_zz
        acc = rbf_sum(p2c, p2r_ref, p, pT, 1.0, acc)    # k_pp
        acc = rbf_sum(z2c, p2r_ref, z, pT, -2.0, acc)   # -2 * k_zp
        acc = acc * vrow_ref[...]                 # mask padded columns
        out_ref[...] = (jnp.sum(acc, axis=1, keepdims=True)
                        * vcol_ref[...] * scale)  # mask padded rows

    return kernel


def _mmd_tiles(b):
    if b <= 8:
        return b, b
    if b <= 256:
        tb = max(8, ((b // 2) // 8) * 8)          # >=2 row tiles (v7x megacore)
        return tb, ((b + tb - 1) // tb) * tb
    tb = 128                                      # bounds VMEM for large B
    return tb, ((b + tb - 1) // tb) * tb


def mmd_pallas(z_flat, z_prior, sigma_list):
    b, d = z_flat.shape
    tb, b_pad = _mmd_tiles(b)
    z = z_flat.astype(jnp.float32)                # latent arrays are small
    p = z_prior.astype(jnp.float32)
    if b_pad > b:
        pad = ((0, b_pad - b), (0, 0))
        z = jnp.pad(z, pad)
        p = jnp.pad(p, pad)
    zT = z.T                                      # (D, B_pad), tiny wrapper op
    pT = p.T
    z2_row = jnp.sum(z * z, axis=1)[None, :]      # (1, B_pad)
    p2_row = jnp.sum(p * p, axis=1)[None, :]
    valid = (jnp.arange(b_pad) < b).astype(jnp.float32)
    vcol = valid[:, None]                         # (B_pad, 1)
    vrow = valid[None, :]                         # (1, B_pad)

    kernel = _make_mmd_kernel(tuple(sigma_list), d, b)
    need = 4 * (2 * (2 * tb * d + 2 * d * b_pad + 3 * b_pad + tb)
                + 4 * tb * b_pad + 2 * tb)
    vmem_limit = int(min(max(2 * need, 32 << 20), 64 << 20))

    out = pl.pallas_call(
        kernel,
        out_shape=jax.ShapeDtypeStruct((b_pad, 1), jnp.float32),
        grid=(b_pad // tb,),
        in_specs=[
            pl.BlockSpec((tb, d), lambda i: (i, 0)),        # z row tile
            pl.BlockSpec((tb, d), lambda i: (i, 0)),        # p row tile
            pl.BlockSpec((d, b_pad), lambda i: (0, 0)),     # z^T resident
            pl.BlockSpec((d, b_pad), lambda i: (0, 0)),     # p^T resident
            pl.BlockSpec((1, b_pad), lambda i: (0, 0)),     # ||z||^2 row
            pl.BlockSpec((1, b_pad), lambda i: (0, 0)),     # ||p||^2 row
            pl.BlockSpec((tb, 1), lambda i: (i, 0)),        # row validity
            pl.BlockSpec((1, b_pad), lambda i: (0, 0)),     # col validity
        ],
        out_specs=pl.BlockSpec((tb, 1), lambda i: (i, 0)),
        compiler_params=pltpu.CompilerParams(
            dimension_semantics=("parallel",),
            vmem_limit_bytes=vmem_limit),
    )(z, p, zT, pT, z2_row, p2_row, vcol, vrow)
    return jnp.sum(out)


# ---------------------------------------------------------------------------
# Forward (mirrors OceanWAELoss.forward)
# ---------------------------------------------------------------------------
def ocean_wae_loss(x_recon, x, z, z_prior, ocean_mask=None,
                   lambda_reg=10.0, sigma_list=(0.1, 1.0, 10.0)):
    B, C, H, W = x.shape
    P = C * H * W

    if ocean_mask is not None:
        if ocean_mask.ndim == 2:
            spatial_mask = ocean_mask.astype(jnp.float32)
        elif ocean_mask.ndim == 3:
            spatial_mask = jnp.any(ocean_mask.astype(bool), axis=0).astype(jnp.float32)
        elif ocean_mask.ndim == 4:
            spatial_mask = jnp.any(ocean_mask.astype(bool), axis=(0, 1)).astype(jnp.float32)
        else:
            raise ValueError(f"Format de masque invalide: {ocean_mask.shape}")
        if spatial_mask.shape != (H, W):
            raise ValueError(
                f"Dimensions du masque ({spatial_mask.shape}) != données ({H}, {W})")
        # Single (1, C*H*W) mask row — never a full (B, C, H, W) broadcast.
        mask_row = jnp.broadcast_to(spatial_mask[None, :, :], (C, H, W)).reshape(1, P)
        ocean_points = jnp.float32(B * C) * jnp.sum(spatial_mask)
    else:
        mask_row = jnp.ones((1, P), jnp.float32)
        ocean_points = jnp.float32(B * C * H * W)

    # Lane-dense (B, C*H*W) views of the big tensors: no astype, no pad copies.
    x2 = x.reshape(B, P)
    xr2 = x_recon.reshape(B, P)

    itemsize = jnp.dtype(x.dtype).itemsize
    sublane = {4: 8, 2: 16, 1: 32}.get(itemsize, 8)   # native dtype tile rows
    tb, b_pad = _choose_batch_tile(B, P * itemsize, sublane)
    tp = _choose_p_tile(P, itemsize, tb)
    if b_pad > B:
        # Rare path: only when B is both too large for one block and not
        # cleanly tileable. Pad rows contribute exactly zero.
        pad = ((0, b_pad - B), (0, 0))
        x2 = jnp.pad(x2, pad)
        xr2 = jnp.pad(xr2, pad)

    row_sums = masked_recon_row_sums(xr2, x2, mask_row, tb, tp)
    recon_loss = jnp.sum(row_sums) / jnp.maximum(ocean_points, 1.0)

    z_flat = z.reshape(z.shape[0], -1)
    z_prior_flat = z_prior.reshape(z_flat.shape)
    mmd_loss = mmd_pallas(z_flat, z_prior_flat, tuple(sigma_list))

    total_loss = recon_loss + jnp.float32(lambda_reg) * mmd_loss

    if ocean_mask is not None:
        # Empty ocean mask -> (0, 0, 0), like the PyTorch early return.
        # TODO(synk): the PyTorch warning print for an empty mask is host-side only.
        empty = ocean_points == 0.0
        zero = jnp.float32(0.0)
        total_loss = jnp.where(empty, zero, total_loss)
        recon_loss = jnp.where(empty, zero, recon_loss)
        mmd_loss = jnp.where(empty, zero, mmd_loss)

    return total_loss, recon_loss, mmd_loss


# ---------------------------------------------------------------------------
# Pure-JAX reference (direct transcription of the PyTorch math) for checking
# ---------------------------------------------------------------------------
def _ref_rbf(x, y, sigma):
    dim = x.shape[1]
    d2 = jnp.mean((x[:, None, :] - y[None, :, :]) ** 2, axis=2) / float(dim)
    return jnp.exp(-d2 / (2.0 * sigma ** 2))


def ref_loss(x_recon, x, z, z_prior, ocean_mask, lambda_reg, sigma_list):
    B, C, H, W = x.shape
    spatial = ocean_mask.astype(jnp.float32)
    new_mask = jnp.broadcast_to(spatial[None, None, :, :], (B, C, H, W))
    xc = jnp.where(jnp.isnan(x), 0.0, x)
    xrc = jnp.where(jnp.isnan(x_recon), 0.0, x_recon)
    err = (xrc * new_mask - xc * new_mask) ** 2
    recon = jnp.sum(err) / jnp.sum(new_mask)
    zf = z.reshape(B, -1)
    zp = z_prior.reshape(B, -1)
    mmd = 0.0
    for s in sigma_list:
        mmd = mmd + (_ref_rbf(zf, zf, s).mean()
                     + _ref_rbf(zp, zp, s).mean()
                     - 2.0 * _ref_rbf(zf, zp, s).mean())
    mmd = mmd / len(sigma_list)
    return recon + lambda_reg * mmd, recon, mmd


if __name__ == "__main__":
    key = jax.random.PRNGKey(0)
    k1, k2, k3, k4, k5 = jax.random.split(key, 5)

    B, C, H, W = 2, 4, 16, 16
    LD, LH, LW = 8, 4, 4                       # latent: D = 8*4*4 = 128

    x = jax.random.normal(k1, (B, C, H, W), jnp.float32)
    x_recon = jax.random.normal(k2, (B, C, H, W), jnp.float32)
    # Inject NaNs to exercise the NaN-cleaning path.
    x = x.at[0, 0, 0, 0].set(jnp.nan)
    x_recon = x_recon.at[1, 2, 3, 4].set(jnp.nan)

    z = jax.random.normal(k3, (B, LD, LH, LW), jnp.float32)
    ocean_mask = jax.random.uniform(k4, (H, W)) > 0.3     # boolean 2D mask
    z_prior = jax.random.normal(k5, (B, LD * LH * LW), jnp.float32)

    lambda_reg = 10.0
    sigma_list = (0.1, 1.0, 10.0)

    total, recon, mmd = ocean_wae_loss(
        x_recon, x, z, z_prior, ocean_mask,
        lambda_reg=lambda_reg, sigma_list=sigma_list)
    (total, recon, mmd) = jax.block_until_ready((total, recon, mmd))

    # Numeric sanity check against the pure-JAX transcription.
    rt, rr, rm = ref_loss(x_recon, x, z, z_prior, ocean_mask,
                          lambda_reg, sigma_list)
    assert jnp.allclose(recon, rr, rtol=1e-4, atol=1e-5), (recon, rr)
    assert jnp.allclose(mmd, rm, rtol=1e-4, atol=1e-5), (mmd, rm)
    assert jnp.allclose(total, rt, rtol=1e-4, atol=1e-5), (total, rt)

    print("KERNEL_OK")
</pallas_src>

<mosaic_0001>
module attributes {stable_mosaic.version = 11 : i64} {
  func.func @_recon_kernel(%arg0: i32, %arg1: i32, %arg2: memref<2x1024xf32, #tpu.memory_space<vmem>>, %arg3: memref<2x1024xf32, #tpu.memory_space<vmem>>, %arg4: memref<1x1024xf32, #tpu.memory_space<vmem>>, %arg5: memref<2x1xf32, #tpu.memory_space<vmem>>) attributes {dimension_semantics = [#tpu.dimension_semantics<parallel>, #tpu.dimension_semantics<arbitrary>], iteration_bounds = array<i64: 1, 1>, scalar_prefetch = 0 : i64, scratch_operands = 0 : i64, tpu.core_type = #tpu.core_type<tc>, window_params = [{transform_indices = @transform_0, window_bounds = array<i64: 2, 1024>}, {transform_indices = @transform_1, window_bounds = array<i64: 2, 1024>}, {transform_indices = @transform_2, window_bounds = array<i64: 1, 1024>}, {transform_indices = @transform_3, window_bounds = array<i64: 2, 1>}]} {
    %c0 = arith.constant 0 : index
    %c0_0 = arith.constant 0 : index
    %0 = vector.load %arg2[%c0, %c0_0] : memref<2x1024xf32, #tpu.memory_space<vmem>>, vector<2x1024xf32>
    %c0_1 = arith.constant 0 : index
    %c0_2 = arith.constant 0 : index
    %1 = vector.load %arg3[%c0_1, %c0_2] : memref<2x1024xf32, #tpu.memory_space<vmem>>, vector<2x1024xf32>
    %c0_3 = arith.constant 0 : index
    %c0_4 = arith.constant 0 : index
    %2 = vector.load %arg4[%c0_3, %c0_4] : memref<1x1024xf32, #tpu.memory_space<vmem>>, vector<1x1024xf32>
    %3 = arith.cmpf one, %0, %0 : vector<2x1024xf32>
    %cst = arith.constant 0.000000e+00 : f32
    %4 = vector.broadcast %cst : f32 to vector<2x1024xf32>
    %5 = arith.select %3, %4, %0 : vector<2x1024xi1>, vector<2x1024xf32>
    %6 = arith.cmpf one, %1, %1 : vector<2x1024xf32>
    %cst_5 = arith.constant 0.000000e+00 : f32
    %7 = vector.broadcast %cst_5 : f32 to vector<2x1024xf32>
    %8 = arith.select %6, %7, %1 : vector<2x1024xi1>, vector<2x1024xf32>
    %9 = arith.subf %5, %8 : vector<2x1024xf32>
    %10 = vector.broadcast %2 : vector<1x1024xf32> to vector<2x1024xf32>
    %11 = arith.mulf %9, %10 : vector<2x1024xf32>
    %12 = arith.mulf %11, %11 : vector<2x1024xf32>
    %cst_6 = arith.constant dense<0.000000e+00> : vector<2xf32>
    %13 = vector.multi_reduction <add>, %12, %cst_6 [1] : vector<2x1024xf32> to vector<2xf32>
    %14 = vector.shape_cast %13 : vector<2xf32> to vector<2x1xf32>
    %c0_i32 = arith.constant 0 : i32
    %15 = arith.cmpi eq, %arg1, %c0_i32 : i32
    %16 = arith.extui %15 : i1 to i32
    %c0_i32_7 = arith.constant 0 : i32
    %17 = arith.cmpi ne, %16, %c0_i32_7 : i32
    scf.if %17 {
      %c0_10 = arith.constant 0 : index
      %c0_11 = arith.constant 0 : index
      %21 = vector.load %arg5[%c0_10, %c0_11] : memref<2x1xf32, #tpu.memory_space<vmem>>, vector<2x1xf32>
      tpu.vector_store %arg5[%c0_10, %c0_11], %14 {strides = array<i32>} : memref<2x1xf32, #tpu.memory_space<vmem>>, vector<2x1xf32>,
    } else {
    }
    %c0_i32_8 = arith.constant 0 : i32
    %18 = arith.cmpi ne, %arg1, %c0_i32_8 : i32
    %19 = arith.extui %18 : i1 to i32
    %c0_i32_9 = arith.constant 0 : i32
    %20 = arith.cmpi ne, %19, %c0_i32_9 : i32
    scf.if %20 {
      %c0_10 = arith.constant 0 : index
      %c0_11 = arith.constant 0 : index
      %21 = vector.load %arg5[%c0_10, %c0_11] : memref<2x1xf32, #tpu.memory_space<vmem>>, vector<2x1xf32>
      %22 = arith.addf %21, %14 : vector<2x1xf32>
      %c0_12 = arith.constant 0 : index
      %c0_13 = arith.constant 0 : index
      %23 = vector.load %arg5[%c0_12, %c0_13] : memref<2x1xf32, #tpu.memory_space<vmem>>, vector<2x1xf32>
      tpu.vector_store %arg5[%c0_12, %c0_13], %22 {strides = array<i32>} : memref<2x1xf32, #tpu.memory_space<vmem>>, vector<2x1xf32>,
    } else {
    }
    return
  }
  func.func @transform_0(%arg0: i32, %arg1: i32) -> (i32, i32) {
    %c0_i32 = arith.constant 0 : i32
    return %arg0, %arg1 : i32, i32
  }
  func.func @transform_1(%arg0: i32, %arg1: i32) -> (i32, i32) {
    %c0_i32 = arith.constant 0 : i32
    return %arg0, %arg1 : i32, i32
  }
  func.func @transform_2(%arg0: i32, %arg1: i32) -> (i32, i32) {
    %c0_i32 = arith.constant 0 : i32
    %c0_i32_0 = arith.constant 0 : i32
    return %c0_i32, %arg1 : i32, i32
  }
  func.func @transform_3(%arg0: i32, %arg1: i32) -> (i32, i32) {
    %c0_i32 = arith.constant 0 : i32
    %c0_i32_0 = arith.constant 0 : i32
    return %arg0, %c0_i32 : i32, i32
  }
}

</mosaic_0001>

<llo_original>
// kernel: tpu_custom_call.1
$region0: #{tpu_custom_call.1}
  #allocation0 [shape = 'u32[]', space=smem, size = 0x4, offset = 0x4, fixed_abs, tag = 'smem constant byte address 0x4 - core index']
  #allocation1 [shape = 'u32[144,128]{1,0:T(1,128)}', space=vmem, size = 0x12000, scoped, tag = 'internal scratch']
  %s0 = inlined_call_operand.hbm [shape: f32[2,1024], index: 0, kind: input, shape index: {}]
  %s1 = inlined_call_operand.hbm [shape: f32[2,1024], index: 1, kind: input, shape index: {}]
  %s2 = inlined_call_operand.hbm [shape: f32[1,1024], index: 2, kind: input, shape index: {}]
  %s3 = inlined_call_operand.vmem [shape: f32[2,1], index: 3, kind: output, shape index: {}]
  %s4 = sld [smem:[#allocation0]]
  $region42: #{tpu_custom_call.1} parent=0
    _
  %s6 = ssub.s32 1, %s4
  %s7 = scalar_select 0, %s6, %s4
  $region1: #{tpu_custom_call.1} parent=0
    #allocation2 [shape = 'u8[8192]{0}', space=vmem, size = 0x2000, scoped, tag = 'input window, operand 0, single buffered']
    #allocation3 [shape = 's32[1]{0}', space=sflag, size = 0x4, scoped, tag = 'scoped memory for tpu_custom_call.1']
    #allocation4 [shape = 'u8[8192]{0}', space=vmem, size = 0x2000, scoped, tag = 'input window, operand 1, single buffered']
    #allocation5 [shape = 's32[1]{0}', space=sflag, size = 0x4, scoped, tag = 'scoped memory for tpu_custom_call.1']
    #allocation6 [shape = 'u8[4096]{0}', space=vmem, size = 0x1000, scoped, tag = 'input window, operand 2, single buffered']
    %8 = vsyncpa [#allocation3], 0
    %9 = vsyncpa [#allocation5], 0
    // Predicated region
    $region2: #{tpu_custom_call.1} parent=1 // pred_check
      _
    $region3: #{tpu_custom_call.1} parent=1 // pred_check_branch
      %11 = sbr.rel (0) target = $region5
    $region4: #{tpu_custom_call.1} parent=1 // pred_region
      %s13 = ssub.s32 256, 256
      %14 = vsyncadd [#allocation3], %s13
      %s16 = sshll.u32 [#allocation2], 4
      %s17 = int_to_ptr.vmem [resolvable:$true] %s16
      %19 = dma.hbm_to_vmem [thread:$0]  %s0, 256, %s17, [#allocation3]
    $region5: #{tpu_custom_call.1} parent=1 // pred_fallthru
      _
    // Predicated region
    $region6: #{tpu_custom_call.1} parent=1 // pred_check
      _
    $region7: #{tpu_custom_call.1} parent=1 // pred_check_branch
      %21 = sbr.rel (0) target = $region9
    $region8: #{tpu_custom_call.1} parent=1 // pred_region
      %s23 = ssub.s32 256, 256
      %24 = vsyncadd [#allocation5], %s23
      %s26 = sshll.u32 [#allocation4], 4
      %s27 = int_to_ptr.vmem [resolvable:$true] %s26
      %29 = dma.hbm_to_vmem [thread:$0]  %s1, 256, %s27, [#allocation5]
    $region9: #{tpu_custom_call.1} parent=1 // pred_fallthru
      _
    // Predicated region
    $region10: #{tpu_custom_call.1} parent=1 // pred_check
      _
    $region11: #{tpu_custom_call.1} parent=1 // pred_check_branch
      %31 = sbr.rel (0) target = $region13
    $region12: #{tpu_custom_call.1} parent=1 // pred_region
      %s33 = ssub.s32 128, 128
      %34 = vsyncadd [#allocation5], %s33
      %s36 = sshll.u32 [#allocation6], 4
      %s37 = int_to_ptr.vmem [resolvable:$true] %s36
      %39 = dma.hbm_to_vmem [thread:$0]  %s2, 128, %s37, [#allocation5]
    $region13: #{tpu_custom_call.1} parent=1 // pred_fallthru
      _
    // Predicated region
    $region14: #{tpu_custom_call.1} parent=1 // pred_check
      _
    $region15: #{tpu_custom_call.1} parent=1 // pred_check_branch
      %41 = sbr.rel (0) target = $region17
    $region16: #{tpu_custom_call.1} parent=1 // pred_region
      %42 = dma.done [#allocation3], 256
    $region17: #{tpu_custom_call.1} parent=1 // pred_fallthru
      _
    // Predicated region
    $region18: #{tpu_custom_call.1} parent=1 // pred_check
      _
    $region19: #{tpu_custom_call.1} parent=1 // pred_check_branch
      %44 = sbr.rel (0) target = $region21
    $region20: #{tpu_custom_call.1} parent=1 // pred_region
      %45 = dma.done [#allocation5], 256
    $region21: #{tpu_custom_call.1} parent=1 // pred_fallthru
      _
    // Predicated region
    $region22: #{tpu_custom_call.1} parent=1 // pred_check
      _
    $region23: #{tpu_custom_call.1} parent=1 // pred_check_branch
      %47 = sbr.rel (0) target = $region25
    $region24: #{tpu_custom_call.1} parent=1 // pred_region
      %48 = dma.done [#allocation5], 128
    $region25: #{tpu_custom_call.1} parent=1 // pred_fallthru
      _
    %v49 = vld [vmem:[#allocation2] sm:$0xff]
    %v50 = vld [vmem:[#allocation2 + $0x8] sm:$0xff]
    %v51 = vld [vmem:[#allocation4] sm:$0xff]
    %v52 = vld [vmem:[#allocation4 + $0x8] sm:$0xff]
    %v53 = vld [vmem:[#allocation6] sm:$0xff]
    %vm54 = vcmp.ne.f32.partialorder %v49, %v49
    %vm55 = vcmp.ne.f32.partialorder %v50, %v50
    %v56 = vsel %vm54, 0.0, %v49
    %v57 = vsel %vm55, 0.0, %v50
    %vm58 = vcmp.ne.f32.partialorder %v51, %v51
    %vm59 = vcmp.ne.f32.partialorder %v52, %v52
    %v60 = vsel %vm58, 0.0, %v51
    %v61 = vsel %vm59, 0.0, %v52
    %v62 = vsub.f32 %v56, %v60
    %v63 = vsub.f32 %v57, %v61
    %v65 = vlaneseq
    %v66 = vshrl.u32 %v65, 7
    %v67 = vsub.s32 0, %v66
    %v68 = vrot.slane %v53, %v67
    %v69 = vlaneseq
    %v70 = vshrl.u32 %v69, 7
    %v71 = vsub.s32 1, %v70
    %v72 = vrot.slane %v53, %v71
    %v73 = vlaneseq
    %v74 = vshrl.u32 %v73, 7
    %v75 = vsub.s32 2, %v74
    %v76 = vrot.slane %v53, %v75
    %v77 = vlaneseq
    %v78 = vshrl.u32 %v77, 7
    %v79 = vsub.s32 3, %v78
    %v80 = vrot.slane %v53, %v79
    %v81 = vlaneseq
    %v82 = vshrl.u32 %v81, 7
    %v83 = vsub.s32 4, %v82
    %v84 = vrot.slane %v53, %v83
    %v85 = vlaneseq
    %v86 = vshrl.u32 %v85, 7
    %v87 = vsub.s32 5, %v86
    %v88 = vrot.slane %v53, %v87
    %v89 = vlaneseq
    %v90 = vshrl.u32 %v89, 7
    %v91 = vsub.s32 6, %v90
    %v92 = vrot.slane %v53, %v91
    %v93 = vlaneseq
    %v94 = vshrl.u32 %v93, 7
    %v95 = vsub.s32 7, %v94
    %v96 = vrot.slane %v53, %v95
    %v97 = vcombine.low %v68, %v72
    %v98 = vcombine.low %v76, %v80
    %v100 = vunpack.c.l.s4 1983009808
    %v101 = vunpack.c.0.s8 %v100
    %v102 = vlaneseq
    %v103 = vshrl.u32 %v102, 7
    %v104 = vsub.s32 %v101, %v103
    %v105 = vrot.slane %v97, %v104
    %v107 = vunpack.c.l.s4 1983009808
    %v108 = vunpack.c.0.s8 %v107
    %v109 = vlaneseq
    %v110 = vshrl.u32 %v109, 7
    %v111 = vsub.s32 %v108, %v110
    %v112 = vrot.slane %v98, %v111
    %v113 = vcombine.low %v105, %v112
    %v114 = vcombine.low %v84, %v88
    %v115 = vcombine.low %v92, %v96
    %v117 = vunpack.c.l.s4 1983009808
    %v118 = vunpack.c.0.s8 %v117
    %v119 = vlaneseq
    %v120 = vshrl.u32 %v119, 7
    %v121 = vsub.s32 %v118, %v120
    %v122 = vrot.slane %v114, %v121
    %v124 = vunpack.c.l.s4 1983009808
    %v125 = vunpack.c.0.s8 %v124
    %v126 = vlaneseq
    %v127 = vshrl.u32 %v126, 7
    %v128 = vsub.s32 %v125, %v127
    %v129 = vrot.slane %v115, %v128
    %v130 = vcombine.low %v122, %v129
    %v133 = vmul.f32 %v62, %v113
    %v134 = vmul.f32 %v63, %v130
    %v135 = vmul.f32 %v133, %v133
    %v136 = vmul.f32 %v134, %v134
    %v139 = vcombine.high %v135, %v135
    %v141 = vunpack.c.l.s4 1983009808
    %v142 = vunpack.c.0.s8 %v141
    %v143 = vlaneseq
    %v144 = vshrl.u32 %v143, 7
    %v145 = vsub.s32 %v142, %v144
    %v146 = vrot.slane %v135, %v145
    %v148 = vunpack.c.l.s4 1983009808
    %v149 = vunpack.c.0.s8 %v148
    %v150 = vlaneseq
    %v151 = vshrl.u32 %v150, 7
    %v152 = vsub.s32 %v149, %v151
    %v153 = vrot.slane %v139, %v152
    %v154 = vcombine.high %v146, %v146
    %v155 = vcombine.high %v153, %v153
    %v156 = vcombine.high %v136, %v136
    %v158 = vunpack.c.l.s4 1983009808
    %v159 = vunpack.c.0.s8 %v158
    %v160 = vlaneseq
    %v161 = vshrl.u32 %v160, 7
    %v162 = vsub.s32 %v159, %v161
    %v163 = vrot.slane %v136, %v162
    %v165 = vunpack.c.l.s4 1983009808
    %v166 = vunpack.c.0.s8 %v165
    %v167 = vlaneseq
    %v168 = vshrl.u32 %v167, 7
    %v169 = vsub.s32 %v166, %v168
    %v170 = vrot.slane %v156, %v169
    %v171 = vcombine.high %v163, %v163
    %v172 = vcombine.high %v170, %v170
    %vm181 = vcmask 1041408
    %v182 = vsel %vm181, %v146, 0.0
    %v183 = vsel %vm181, %v154, 0.0
    %v184 = vadd.f32 %v182, %v183
    %v185 = vsel %vm181, %v153, 0.0
    %v186 = vadd.f32 %v184, %v185
    %v187 = vsel %vm181, %v155, 0.0
    %v188 = vadd.f32 %v186, %v187
    %v189 = vsel %vm181, %v163, 0.0
    %v190 = vadd.f32 %v188, %v189
    %v191 = vsel %vm181, %v171, 0.0
    %v192 = vadd.f32 %v190, %v191
    %v193 = vsel %vm181, %v170, 0.0
    %v194 = vadd.f32 %v192, %v193
    %v195 = vsel %vm181, %v172, 0.0
    %v196 = vadd.f32 %v194, %v195
    %197 = vadd.xlane.f32.xlu0 %v196
    %v198 = vpop.xlane.xlu0 %197
    %p199 = scmp.eq.s32.totalorder 0, 0
    // Predicated region
    $region26: #{tpu_custom_call.1} parent=1 // pred_check
      %p200 = pneg %p199
    $region27: #{tpu_custom_call.1} parent=1 // pred_check_branch
      %202 = sbr.rel (%p200) target = $region29
    $region28: #{tpu_custom_call.1} parent=1 // pred_region
      %vm203 = vcmask 1024
      %204 = vst.msk [vmem:[%s3] sm:$0x3] %vm203, %v198
    $region29: #{tpu_custom_call.1} parent=1 // pred_fallthru
      _
    %p205 = scmp.ne.s32.totalorder 0, 0
    // Predicated region
    $region30: #{tpu_custom_call.1} parent=1 // pred_check
      %p206 = pneg %p205
    $region31: #{tpu_custom_call.1} parent=1 // pred_check_branch
      %208 = sbr.rel (%p206) target = $region33
    $region32: #{tpu_custom_call.1} parent=1 // pred_region
      %v209 = vld [vmem:[%s3] sm:$0x3]
      %v210 = vadd.f32 %v209, %v198
      %vm211 = vcmask 1024
      %212 = vst.msk [vmem:[%s3] sm:$0x3] %vm211, %v210
    $region33: #{tpu_custom_call.1} parent=1 // pred_fallthru
      _
    // Predicated region
    $region34: #{tpu_custom_call.1} parent=1 // pred_check
      _
    $region35: #{tpu_custom_call.1} parent=1 // pred_check_branch
      %214 = sbr.rel (0) target = $region37
    $region36: #{tpu_custom_call.1} parent=1 // pred_region
      _
    $region37: #{tpu_custom_call.1} parent=1 // pred_fallthru
      _
    // Predicated region
    $region38: #{tpu_custom_call.1} parent=1 // pred_check
      _
    $region39: #{tpu_custom_call.1} parent=1 // pred_check_branch
      %216 = sbr.rel (0) target = $region41
    $region40: #{tpu_custom_call.1} parent=1 // pred_region
      _
    $region41: #{tpu_custom_call.1} parent=1 // pred_fallthru
      _
    %217 = vsyncpa [#allocation3], 1
    %218 = vsyncpa [#allocation5], 1

</llo_original>
